<compile_context>
chip_gen: v5e
topology: v5e:2x2
jax: 0.10.0
libtpu: 0.0.40
codegen_flags: <defaults>
</compile_context>

<pallas_src>
import functools

import jax
import jax.numpy as jnp
from jax import lax
from jax.experimental import pallas as pl
from jax.experimental.pallas import tpu as pltpu

F32 = jnp.float32
BF16 = jnp.bfloat16
_VMEM = pl.BlockSpec(memory_space=pltpu.MemorySpace.VMEM)
_SMEM = pl.BlockSpec(memory_space=pltpu.MemorySpace.SMEM)
_CPARAMS = pltpu.CompilerParams(vmem_limit_bytes=64 * 1024 * 1024)


def _bn_elu(h, gamma, beta, eps=1e-5):
    """BatchNorm1d (training mode: batch stats, biased var) followed by ELU."""
    mu = jnp.mean(h, axis=0, keepdims=True)
    var = jnp.mean((h - mu) ** 2, axis=0, keepdims=True)
    h = (h - mu) * lax.rsqrt(var + eps) * gamma + beta
    return jnp.where(h > 0, h, jnp.exp(h) - 1.0)          # ELU (alpha=1)


# ---------------- fused AttentionalAggregation + MLP0 (pooling_q, mlp0) ------

def _pool_mlp0_kernel(x_ref, ids_ref, gw_ref, gb_ref,
                      w1_ref, b1_ref, g1_ref, be1_ref,
                      w2_ref, b2_ref, g2_ref, be2_ref, o_ref, *, num_graphs):
    x = x_ref[...]                                                     # [N, D]
    # gate logits as a row vector: [1,D] x [N,D]^T -> [1,N]  (no transpose)
    gate = lax.dot_general(gw_ref[...], x, (((1,), (1,)), ((), ())),
                           preferred_element_type=F32) + gb_ref[0, 0]
    ids = ids_ref[...]                                                 # [1, N] int32
    g_iota = lax.broadcasted_iota(jnp.int32, (num_graphs, ids.shape[1]), 0)
    member = ids == g_iota                                             # [G, N]
    masked = jnp.where(member, gate, -1e30)
    mx = jnp.max(masked, axis=1, keepdims=True)
    p = jnp.exp(masked - mx) * member.astype(F32)
    p = p / jnp.maximum(jnp.sum(p, axis=1, keepdims=True), 1e-30)
    pooled = jnp.dot(p, x, preferred_element_type=F32)                 # [G, D]
    # mlp0: Linear -> BN -> ELU -> Linear -> BN -> ELU
    h = jnp.dot(pooled, w1_ref[...], preferred_element_type=F32) + b1_ref[...]
    h = _bn_elu(h, g1_ref[...], be1_ref[...])
    h = jnp.dot(h, w2_ref[...], preferred_element_type=F32) + b2_ref[...]
    h = _bn_elu(h, g2_ref[...], be2_ref[...])
    o_ref[...] = h


def pallas_pool_mlp0(h_q, query_batch, gate_w, gate_b, mlp0, num_graphs):
    w1, b1, g1, be1, w2, b2, g2, be2 = mlp0
    ids = query_batch.astype(jnp.int32).reshape(1, -1)
    kernel = functools.partial(_pool_mlp0_kernel, num_graphs=num_graphs)
    return pl.pallas_call(
        kernel,
        out_shape=jax.ShapeDtypeStruct((num_graphs, w2.shape[1]), F32),
        in_specs=[_VMEM, _VMEM, _VMEM, _SMEM] + [_VMEM] * 8,
        out_specs=_VMEM,
    )(h_q, ids, gate_w, gate_b, w1, b1, g1, be1, w2, b2, g2, be2)


# ------------------------------- AEDGATConv ----------------------------------

def _gat_kernel(*refs, heads, out_ch, negative_slope, has_premul):
    if has_premul:
        (mm_ref, xin_ref, wt_ref, att_ref, adj_ref, bias_ref,
         out_ref, score_ref, m_ref, d_ref) = refs
        # fused n = mm @ h_t (bf16 MXU, f32 accumulate), never leaves VMEM
        x = jnp.dot(mm_ref[...], xin_ref[...],
                    preferred_element_type=F32).astype(BF16)
    else:
        (xin_ref, wt_ref, att_ref, adj_ref, bias_ref,
         out_ref, score_ref, m_ref, d_ref) = refs
        x = xin_ref[...]                                               # bf16 [N, Din]

    hc = heads * out_ch
    # fused projection for all heads: one lane-dense [N, heads*C] matmul
    xw = jnp.dot(x, wt_ref[...], preferred_element_type=F32)          # [N, HC] f32
    sprod = xw * att_ref[...]                                         # [N, HC] f32
    # per-head score via block-diagonal indicator matmul (keeps lane-dense layout)
    hh = lax.broadcasted_iota(jnp.int32, (heads, hc), 0)
    jj = lax.broadcasted_iota(jnp.int32, (heads, hc), 1)
    blk = ((jj >= hh * out_ch) & (jj < (hh + 1) * out_ch)).astype(F32)  # [H, HC]
    score = lax.dot_general(blk, sprod, (((1,), (1,)), ((), ())),
                            preferred_element_type=F32)               # [H, N]
    score = jnp.where(score >= 0, score, negative_slope * score)      # leaky_relu

    adj = adj_ref[...].astype(F32)                                    # [N(dst), N(src)]
    xw_bf = xw.astype(BF16)
    out_cols = []
    # heads is small and static; per-head [N,N] intermediates are consumed in-iteration.
    for h in range(heads):
        s_row = score[h:h + 1, :]                                     # [1, N(src)]
        masked = jnp.where(adj > 0, s_row, -1e30)                     # [N, N]
        m = jnp.max(masked, axis=-1, keepdims=True)                   # [N, 1]
        p = jnp.exp(masked - m) * adj
        d = jnp.sum(p, axis=-1, keepdims=True)                        # [N, 1]
        alpha = p / jnp.maximum(d, 1e-30)
        out_cols.append(jnp.dot(alpha.astype(BF16),
                                xw_bf[:, h * out_ch:(h + 1) * out_ch],
                                preferred_element_type=F32))          # [N, C]
        m_ref[h] = m
        d_ref[h] = d
    # single lane-dense [N, heads*C] store
    out_ref[...] = jnp.concatenate(out_cols, axis=1) + bias_ref[...]
    score_ref[...] = score


def pallas_gat(*, x, premul, wt, att, adj, bias, heads, out_channels,
               negative_slope=0.2):
    N = adj.shape[0]
    hc = heads * out_channels
    has_premul = premul is not None
    kernel = functools.partial(_gat_kernel, heads=heads, out_ch=out_channels,
                               negative_slope=negative_slope,
                               has_premul=has_premul)
    inputs = (premul + (wt, att, adj, bias)) if has_premul else (x, wt, att, adj, bias)
    return pl.pallas_call(
        kernel,
        out_shape=(jax.ShapeDtypeStruct((N, hc), F32),         # lane-dense output
                   jax.ShapeDtypeStruct((heads, N), F32),      # per-src leaky score
                   jax.ShapeDtypeStruct((heads, N, 1), F32),   # per-dst row max
                   jax.ShapeDtypeStruct((heads, N, 1), F32)),  # per-dst softmax denom
        in_specs=[_VMEM] * len(inputs),
        out_specs=(_VMEM, _VMEM, _VMEM, _VMEM),
        compiler_params=_CPARAMS,
    )(*inputs)


# ------------- fused MLP1 (x2) + Similarity + MatchingMatrixNormalization ----

def _mlp_match_kernel(ht_gat_ref, ht_res_ref, hq_gat_ref, hq_res_ref, mask_ref,
                      w1_ref, b1_ref, g1_ref, be1_ref,
                      w2_ref, b2_ref, g2_ref, be2_ref, tau_ref,
                      ht_out_ref, hq_out_ref, mm_ref, *, h_dim):
    w1, b1, g1, be1 = w1_ref[...], b1_ref[...], g1_ref[...], be1_ref[...]
    w2, b2, g2, be2 = w2_ref[...], b2_ref[...], g2_ref[...], be2_ref[...]

    def mlp1(xg, res):
        h = jnp.dot(xg, w1, preferred_element_type=F32) + b1
        h = _bn_elu(h, g1, be1)
        h = jnp.dot(h, w2, preferred_element_type=F32) + b2
        h = _bn_elu(h, g2, be2)
        return h + res                                       # residual add

    ht_new = mlp1(ht_gat_ref[...], ht_res_ref[...])          # [Nt, D]  (own BN stats)
    hq_new = mlp1(hq_gat_ref[...], hq_res_ref[...])          # [Nq, D]  (own BN stats)
    ht_out_ref[...] = ht_new
    hq_out_ref[...] = hq_new

    tau = tau_ref[0, 0]
    # fold 1/sqrt(h_dim) and 1/sigmoid(tau) = (1 + exp(-tau)) into hq
    scale = (1.0 + jnp.exp(-tau)) / (h_dim ** 0.5)
    sim = lax.dot_general((hq_new * scale).astype(BF16), ht_new.astype(BF16),
                          (((1,), (1,)), ((), ())),
                          preferred_element_type=F32)        # [Nq, Nt], no transpose
    maskf = mask_ref[...]
    logits = jnp.where(maskf > 0, sim, -1e9)
    mx = jnp.max(logits, axis=1, keepdims=True)
    e = jnp.exp(logits - mx)
    mm_ref[...] = e / jnp.sum(e, axis=1, keepdims=True)      # softmax over dim=1


def pallas_mlp1_matching(h_t_gat, h_t, h_q_gat, h_q, mlp1, maskf, tau, *, h_dim):
    w1, b1, g1, be1, w2, b2, g2, be2 = mlp1
    Nt, Nq = h_t.shape[0], h_q.shape[0]
    kernel = functools.partial(_mlp_match_kernel, h_dim=h_dim)
    return pl.pallas_call(
        kernel,
        out_shape=(jax.ShapeDtypeStruct((Nt, h_dim), F32),
                   jax.ShapeDtypeStruct((Nq, h_dim), F32),
                   jax.ShapeDtypeStruct((Nq, Nt), F32)),
        in_specs=[_VMEM] * 13 + [_SMEM],
        out_specs=(_VMEM, _VMEM, _VMEM),
        compiler_params=_CPARAMS,
    )(h_t_gat, h_t, h_q_gat, h_q, maskf, w1, b1, g1, be1, w2, b2, g2, be2, tau)


# ------------------------------ Layer glue -----------------------------------

def init_params(key, h_dim=32, heads=8):
    ks = iter(jax.random.split(key, 32))

    def w(shape, scale=0.1):
        return scale * jax.random.normal(next(ks), shape, F32)

    def bn(dim):
        gamma = 1.0 + 0.05 * jax.random.normal(next(ks), (1, dim), F32)
        beta = 0.05 * jax.random.normal(next(ks), (1, dim), F32)
        return gamma, beta

    def mlp_params(din, dhid, dout):
        w1, b1 = w((din, dhid)), w((1, dhid))
        g1, be1 = bn(dhid)
        w2, b2 = w((dhid, dout)), w((1, dout))
        g2, be2 = bn(dout)
        return (w1, b1, g1, be1, w2, b2, g2, be2)

    return {
        'gate_w': w((1, h_dim)),                          # pooling_q.gate_nn: Linear(h_dim, 1)
        'gate_b': w((1, 1)),
        'mlp0': mlp_params(h_dim, 2 * h_dim, 2 * heads * h_dim),
        'gat_wt': w((h_dim, heads * h_dim)),              # gat.lin weight, [Din, heads*C]
        'gat_bias': jnp.zeros((1, heads * h_dim), F32),   # gat.bias initialized to zeros
        'mlp1': mlp_params(heads * h_dim, 2 * h_dim, h_dim),
        'tau': jnp.zeros((1, 1), F32),                    # MatchingMatrixNormalization.tau = 0
    }


def aedgat_layer_forward(params, h_t, h_q, target_edge_index, target_batch,
                         query_edge_index, query_batch, num_graphs, mask, mm_in,
                         h_t0=None, h_q0=None, *, h_dim=32, heads=8):
    # h_t0 / h_q0 accepted for signature parity; the reference forward never uses them.
    maskf = mask.astype(F32)

    # q = mlp0(pooling_q(h_q)); only the first h_dim half of each head is used downstream
    q = pallas_pool_mlp0(h_q, query_batch, params['gate_w'], params['gate_b'],
                         params['mlp0'], num_graphs)                 # [G, 2*heads*h_dim]
    q1 = q.reshape(num_graphs, heads, 2 * h_dim)[:, :, :h_dim]
    q1 = q1.reshape(num_graphs, heads * h_dim)                       # [G, heads*h_dim]

    wt_bf = params['gat_wt'].astype(BF16)
    h_t_bf = h_t.astype(BF16)

    def run_gat(edge_index, batch, *, x=None, premul=None):
        src, dst = edge_index[0], edge_index[1]
        N = batch.shape[0]
        att_flat = q1[batch]                                         # [N, heads*h_dim]
        adj = jnp.zeros((N, N), F32).at[dst, src].set(1.0).astype(BF16)
        out, score_hn, m_h, d_h = pallas_gat(
            x=x, premul=premul, wt=wt_bf, att=att_flat, adj=adj,
            bias=params['gat_bias'], heads=heads, out_channels=h_dim)
        # exact per-edge softmaxed attention from per-node statistics (O(E) gather)
        a_edge = (jnp.exp(score_hn[:, src] - m_h[:, dst, 0]) / d_h[:, dst, 0]).T
        return out, a_edge

    h_t_gat, a_t = run_gat(target_edge_index, target_batch, x=h_t_bf)
    # n = mm @ h_t is fused into the query-side GAT projection
    h_q_gat, a_q = run_gat(query_edge_index, query_batch,
                           premul=(mm_in.astype(BF16), h_t_bf))

    h_t_new, h_q_new, mm_out = pallas_mlp1_matching(
        h_t_gat, h_t, h_q_gat, h_q, params['mlp1'], maskf, params['tau'],
        h_dim=h_dim)
    return h_t_new, h_q_new, a_t, a_q, mm_out


# --------------------------------- main ---------------------------------------

if __name__ == "__main__":
    h_dim, heads = 32, 8
    num_graphs = 2
    npg_t, npg_q = 8, 8
    Nt, Nq = num_graphs * npg_t, num_graphs * npg_q

    key = jax.random.PRNGKey(0)
    kp, k1, k2, k3, k4, k5 = jax.random.split(key, 6)
    params = init_params(kp, h_dim, heads)

    h_t = jax.random.normal(k1, (Nt, h_dim), F32)
    h_q = jax.random.normal(k2, (Nq, h_dim), F32)
    h_t0 = jax.random.normal(k3, (Nt, h_dim), F32)   # unused by the forward pass
    h_q0 = jax.random.normal(k4, (Nq, h_dim), F32)   # unused by the forward pass

    def ring_edges(g_count, npg):
        src, dst = [], []
        for g in range(g_count):
            o = g * npg
            for i in range(npg):
                a, b = o + i, o + (i + 1) % npg
                src += [a, b]
                dst += [b, a]
        return jnp.array([src, dst], dtype=jnp.int32)

    target_edge_index = ring_edges(num_graphs, npg_t)                 # [2, 32]
    query_edge_index = ring_edges(num_graphs, npg_q)                  # [2, 32]
    target_batch = jnp.repeat(jnp.arange(num_graphs), npg_t)
    query_batch = jnp.repeat(jnp.arange(num_graphs), npg_q)

    # block-diagonal query->target mask (query graph g matches target graph g)
    mask = jnp.kron(jnp.eye(num_graphs), jnp.ones((npg_q, npg_t))).astype(bool)
    mm_in = jax.nn.softmax(jax.random.normal(k5, (Nq, Nt), F32), axis=1)

    outs = aedgat_layer_forward(params, h_t, h_q, target_edge_index, target_batch,
                                query_edge_index, query_batch, num_graphs, mask, mm_in,
                                h_t0, h_q0, h_dim=h_dim, heads=heads)
    outs = jax.block_until_ready(outs)
    h_t_new, h_q_new, a_t, a_q, mm_out = outs

    assert h_t_new.shape == (Nt, h_dim) and h_q_new.shape == (Nq, h_dim)
    assert a_t.shape == (target_edge_index.shape[1], heads)
    assert a_q.shape == (query_edge_index.shape[1], heads)
    assert mm_out.shape == (Nq, Nt)
    for arr in outs:
        assert bool(jnp.all(jnp.isfinite(arr)))
    # matching matrix rows are a softmax
    assert bool(jnp.allclose(jnp.sum(mm_out, axis=1), 1.0, atol=1e-5))
    # per-destination edge attention sums to 1 for every head (softmax over incoming edges)
    alpha_sum_t = jnp.zeros((Nt, heads), F32).at[target_edge_index[1]].add(a_t)
    alpha_sum_q = jnp.zeros((Nq, heads), F32).at[query_edge_index[1]].add(a_q)
    assert bool(jnp.allclose(alpha_sum_t, 1.0, atol=1e-4))
    assert bool(jnp.allclose(alpha_sum_q, 1.0, atol=1e-4))

    print("KERNEL_OK")
</pallas_src>

<mosaic_0001>
module attributes {stable_mosaic.version = 11 : i64} {
  func.func @_pool_mlp0_kernel(%arg0: memref<16x32xf32, #tpu.memory_space<vmem>>, %arg1: memref<1x16xi32, #tpu.memory_space<vmem>>, %arg2: memref<1x32xf32, #tpu.memory_space<vmem>>, %arg3: memref<1x1xf32, #tpu.memory_space<smem>>, %arg4: memref<32x64xf32, #tpu.memory_space<vmem>>, %arg5: memref<1x64xf32, #tpu.memory_space<vmem>>, %arg6: memref<1x64xf32, #tpu.memory_space<vmem>>, %arg7: memref<1x64xf32, #tpu.memory_space<vmem>>, %arg8: memref<64x512xf32, #tpu.memory_space<vmem>>, %arg9: memref<1x512xf32, #tpu.memory_space<vmem>>, %arg10: memref<1x512xf32, #tpu.memory_space<vmem>>, %arg11: memref<1x512xf32, #tpu.memory_space<vmem>>, %arg12: memref<2x512xf32, #tpu.memory_space<vmem>>) attributes {dimension_semantics = [], scalar_prefetch = 0 : i64, scratch_operands = 0 : i64, tpu.core_type = #tpu.core_type<tc>} {
    %c0 = arith.constant 0 : index
    %c0_0 = arith.constant 0 : index
    %0 = vector.load %arg0[%c0, %c0_0] : memref<16x32xf32, #tpu.memory_space<vmem>>, vector<16x32xf32>
    %c0_1 = arith.constant 0 : index
    %c0_2 = arith.constant 0 : index
    %1 = vector.load %arg2[%c0_1, %c0_2] : memref<1x32xf32, #tpu.memory_space<vmem>>, vector<1x32xf32>
    %cst = arith.constant dense<0.000000e+00> : vector<1x16xf32>
    %2 = tpu.matmul %1, %0, %cst {dimension_numbers = #tpu.dot_dimension_numbers<[1], [1], [0], [0], [0, 0, 1, 0], [], []>} : vector<1x32xf32>, vector<16x32xf32>, vector<1x16xf32> -> vector<1x16xf32>
    %c0_3 = arith.constant 0 : index
    %c0_4 = arith.constant 0 : index
    %3 = memref.load %arg3[%c0_3, %c0_4] : memref<1x1xf32, #tpu.memory_space<smem>>
    %4 = vector.broadcast %3 : f32 to vector<1x16xf32>
    %5 = arith.addf %2, %4 : vector<1x16xf32>
    %c0_5 = arith.constant 0 : index
    %c0_6 = arith.constant 0 : index
    %6 = vector.load %arg1[%c0_5, %c0_6] : memref<1x16xi32, #tpu.memory_space<vmem>>, vector<1x16xi32>
    %7 = tpu.iota {dimensions = array<i32: 0>} : vector<2x16xi32>
    %8 = vector.broadcast %6 : vector<1x16xi32> to vector<2x16xi32>
    %9 = arith.cmpi eq, %8, %7 : vector<2x16xi32>
    %cst_7 = arith.constant -1.000000e+30 : f32
    %10 = vector.shape_cast %5 : vector<1x16xf32> to vector<1x16xf32>
    %11 = vector.broadcast %10 : vector<1x16xf32> to vector<2x16xf32>
    %12 = vector.broadcast %cst_7 : f32 to vector<2x16xf32>
    %13 = arith.select %9, %11, %12 : vector<2x16xi1>, vector<2x16xf32>
    %cst_8 = arith.constant dense<0xFF800000> : vector<2xf32>
    %14 = vector.multi_reduction <maximumf>, %13, %cst_8 [1] : vector<2x16xf32> to vector<2xf32>
    %15 = vector.shape_cast %14 : vector<2xf32> to vector<2x1xf32>
    %16 = vector.broadcast %15 : vector<2x1xf32> to vector<2x16xf32>
    %17 = arith.subf %13, %16 : vector<2x16xf32>
    %18 = math.exp %17 : vector<2x16xf32>
    %19 = arith.extui %9 : vector<2x16xi1> to vector<2x16xi32>
    %20 = arith.sitofp %19 : vector<2x16xi32> to vector<2x16xf32>
    %21 = arith.mulf %18, %20 : vector<2x16xf32>
    %cst_9 = arith.constant dense<0.000000e+00> : vector<2xf32>
    %22 = vector.multi_reduction <add>, %21, %cst_9 [1] : vector<2x16xf32> to vector<2xf32>
    %23 = vector.shape_cast %22 : vector<2xf32> to vector<2x1xf32>
    %cst_10 = arith.constant 1.000000e-30 : f32
    %24 = vector.broadcast %cst_10 : f32 to vector<2x1xf32>
    %25 = arith.maximumf %23, %24 : vector<2x1xf32>
    %26 = vector.broadcast %25 : vector<2x1xf32> to vector<2x16xf32>
    %27 = arith.divf %21, %26 : vector<2x16xf32>
    %cst_11 = arith.constant dense<0.000000e+00> : vector<2x32xf32>
    %28 = tpu.matmul %27, %0, %cst_11 {dimension_numbers = #tpu.dot_dimension_numbers<[1], [0], [0], [1], [0, 0, 1, 1], [], []>} : vector<2x16xf32>, vector<16x32xf32>, vector<2x32xf32> -> vector<2x32xf32>
    %c0_12 = arith.constant 0 : index
    %c0_13 = arith.constant 0 : index
    %29 = vector.load %arg4[%c0_12, %c0_13] : memref<32x64xf32, #tpu.memory_space<vmem>>, vector<32x64xf32>
    %cst_14 = arith.constant dense<0.000000e+00> : vector<2x64xf32>
    %30 = tpu.matmul %28, %29, %cst_14 {dimension_numbers = #tpu.dot_dimension_numbers<[1], [0], [0], [1], [0, 0, 1, 1], [], []>} : vector<2x32xf32>, vector<32x64xf32>, vector<2x64xf32> -> vector<2x64xf32>
    %c0_15 = arith.constant 0 : index
    %c0_16 = arith.constant 0 : index
    %31 = vector.load %arg5[%c0_15, %c0_16] : memref<1x64xf32, #tpu.memory_space<vmem>>, vector<1x64xf32>
    %32 = vector.broadcast %31 : vector<1x64xf32> to vector<2x64xf32>
    %33 = arith.addf %30, %32 : vector<2x64xf32>
    %c0_17 = arith.constant 0 : index
    %c0_18 = arith.constant 0 : index
    %34 = vector.load %arg6[%c0_17, %c0_18] : memref<1x64xf32, #tpu.memory_space<vmem>>, vector<1x64xf32>
    %c0_19 = arith.constant 0 : index
    %c0_20 = arith.constant 0 : index
    %35 = vector.load %arg7[%c0_19, %c0_20] : memref<1x64xf32, #tpu.memory_space<vmem>>, vector<1x64xf32>
    %cst_21 = arith.constant dense<0.000000e+00> : vector<64xf32>
    %36 = vector.multi_reduction <add>, %33, %cst_21 [0] : vector<2x64xf32> to vector<64xf32>
    %37 = vector.shape_cast %36 : vector<64xf32> to vector<1x64xf32>
    %cst_22 = arith.constant 2.000000e+00 : f32
    %38 = vector.broadcast %cst_22 : f32 to vector<1x64xf32>
    %39 = arith.divf %37, %38 : vector<1x64xf32>
    %40 = vector.broadcast %39 : vector<1x64xf32> to vector<2x64xf32>
    %41 = arith.subf %33, %40 : vector<2x64xf32>
    %42 = arith.mulf %41, %41 : vector<2x64xf32>
    %cst_23 = arith.constant dense<0.000000e+00> : vector<64xf32>
    %43 = vector.multi_reduction <add>, %42, %cst_23 [0] : vector<2x64xf32> to vector<64xf32>
    %44 = vector.shape_cast %43 : vector<64xf32> to vector<1x64xf32>
    %cst_24 = arith.constant 2.000000e+00 : f32
    %45 = vector.broadcast %cst_24 : f32 to vector<1x64xf32>
    %46 = arith.divf %44, %45 : vector<1x64xf32>
    %47 = vector.broadcast %39 : vector<1x64xf32> to vector<2x64xf32>
    %48 = arith.subf %33, %47 : vector<2x64xf32>
    %cst_25 = arith.constant 9.99999974E-6 : f32
    %49 = vector.broadcast %cst_25 : f32 to vector<1x64xf32>
    %50 = arith.addf %46, %49 : vector<1x64xf32>
    %51 = math.rsqrt %50 : vector<1x64xf32>
    %52 = vector.broadcast %51 : vector<1x64xf32> to vector<2x64xf32>
    %53 = arith.mulf %48, %52 : vector<2x64xf32>
    %54 = vector.broadcast %34 : vector<1x64xf32> to vector<2x64xf32>
    %55 = arith.mulf %53, %54 : vector<2x64xf32>
    %56 = vector.broadcast %35 : vector<1x64xf32> to vector<2x64xf32>
    %57 = arith.addf %55, %56 : vector<2x64xf32>
    %cst_26 = arith.constant 0.000000e+00 : f32
    %58 = vector.broadcast %cst_26 : f32 to vector<2x64xf32>
    %59 = arith.cmpf ogt, %57, %58 : vector<2x64xf32>
    %60 = math.exp %57 : vector<2x64xf32>
    %cst_27 = arith.constant 1.000000e+00 : f32
    %61 = vector.broadcast %cst_27 : f32 to vector<2x64xf32>
    %62 = arith.subf %60, %61 : vector<2x64xf32>
    %63 = arith.select %59, %57, %62 : vector<2x64xi1>, vector<2x64xf32>
    %c0_28 = arith.constant 0 : index
    %c0_29 = arith.constant 0 : index
    %64 = vector.load %arg8[%c0_28, %c0_29] : memref<64x512xf32, #tpu.memory_space<vmem>>, vector<64x512xf32>
    %cst_30 = arith.constant dense<0.000000e+00> : vector<2x512xf32>
    %65 = tpu.matmul %63, %64, %cst_30 {dimension_numbers = #tpu.dot_dimension_numbers<[1], [0], [0], [1], [0, 0, 1, 1], [], []>} : vector<2x64xf32>, vector<64x512xf32>, vector<2x512xf32> -> vector<2x512xf32>
    %c0_31 = arith.constant 0 : index
    %c0_32 = arith.constant 0 : index
    %66 = vector.load %arg9[%c0_31, %c0_32] : memref<1x512xf32, #tpu.memory_space<vmem>>, vector<1x512xf32>
    %67 = vector.broadcast %66 : vector<1x512xf32> to vector<2x512xf32>
    %68 = arith.addf %65, %67 : vector<2x512xf32>
    %c0_33 = arith.constant 0 : index
    %c0_34 = arith.constant 0 : index
    %69 = vector.load %arg10[%c0_33, %c0_34] : memref<1x512xf32, #tpu.memory_space<vmem>>, vector<1x512xf32>
    %c0_35 = arith.constant 0 : index
    %c0_36 = arith.constant 0 : index
    %70 = vector.load %arg11[%c0_35, %c0_36] : memref<1x512xf32, #tpu.memory_space<vmem>>, vector<1x512xf32>
    %cst_37 = arith.constant dense<0.000000e+00> : vector<512xf32>
    %71 = vector.multi_reduction <add>, %68, %cst_37 [0] : vector<2x512xf32> to vector<512xf32>
    %72 = vector.shape_cast %71 : vector<512xf32> to vector<1x512xf32>
    %cst_38 = arith.constant 2.000000e+00 : f32
    %73 = vector.broadcast %cst_38 : f32 to vector<1x512xf32>
    %74 = arith.divf %72, %73 : vector<1x512xf32>
    %75 = vector.broadcast %74 : vector<1x512xf32> to vector<2x512xf32>
    %76 = arith.subf %68, %75 : vector<2x512xf32>
    %77 = arith.mulf %76, %76 : vector<2x512xf32>
    %cst_39 = arith.constant dense<0.000000e+00> : vector<512xf32>
    %78 = vector.multi_reduction <add>, %77, %cst_39 [0] : vector<2x512xf32> to vector<512xf32>
    %79 = vector.shape_cast %78 : vector<512xf32> to vector<1x512xf32>
    %cst_40 = arith.constant 2.000000e+00 : f32
    %80 = vector.broadcast %cst_40 : f32 to vector<1x512xf32>
    %81 = arith.divf %79, %80 : vector<1x512xf32>
    %82 = vector.broadcast %74 : vector<1x512xf32> to vector<2x512xf32>
    %83 = arith.subf %68, %82 : vector<2x512xf32>
    %cst_41 = arith.constant 9.99999974E-6 : f32
    %84 = vector.broadcast %cst_41 : f32 to vector<1x512xf32>
    %85 = arith.addf %81, %84 : vector<1x512xf32>
    %86 = math.rsqrt %85 : vector<1x512xf32>
    %87 = vector.broadcast %86 : vector<1x512xf32> to vector<2x512xf32>
    %88 = arith.mulf %83, %87 : vector<2x512xf32>
    %89 = vector.broadcast %69 : vector<1x512xf32> to vector<2x512xf32>
    %90 = arith.mulf %88, %89 : vector<2x512xf32>
    %91 = vector.broadcast %70 : vector<1x512xf32> to vector<2x512xf32>
    %92 = arith.addf %90, %91 : vector<2x512xf32>
    %cst_42 = arith.constant 0.000000e+00 : f32
    %93 = vector.broadcast %cst_42 : f32 to vector<2x512xf32>
    %94 = arith.cmpf ogt, %92, %93 : vector<2x512xf32>
    %95 = math.exp %92 : vector<2x512xf32>
    %cst_43 = arith.constant 1.000000e+00 : f32
    %96 = vector.broadcast %cst_43 : f32 to vector<2x512xf32>
    %97 = arith.subf %95, %96 : vector<2x512xf32>
    %98 = arith.select %94, %92, %97 : vector<2x512xi1>, vector<2x512xf32>
    %c0_44 = arith.constant 0 : index
    %c0_45 = arith.constant 0 : index
    %99 = vector.load %arg12[%c0_44, %c0_45] : memref<2x512xf32, #tpu.memory_space<vmem>>, vector<2x512xf32>
    tpu.vector_store %arg12[%c0_44, %c0_45], %98 {strides = array<i32>} : memref<2x512xf32, #tpu.memory_space<vmem>>, vector<2x512xf32>,
    return
  }
}

</mosaic_0001>

<llo_original>
// kernel: tpu_custom_call.1
$region0: #{tpu_custom_call.1}
  #allocation0 [shape = 'u32[]', space=smem, size = 0x4, offset = 0x4, fixed_abs, tag = 'smem constant byte address 0x4 - core index']
  #allocation1 [shape = 'u32[72,128]{1,0:T(1,128)}', space=vmem, size = 0x9000, scoped, tag = 'internal scratch']
  #allocation2 [shape = 'f32[1,1]{1,0:T(1,128)S(6)}', space=smem, size = 0x200, scoped, tag = 'scoped memory for tpu_custom_call.1']
  %s0 = inlined_call_operand.hbm [shape: f32[16,32], index: 0, kind: input, shape index: {}]
  %s1 = inlined_call_operand.hbm [shape: s32[1,16], index: 1, kind: input, shape index: {}]
  %s2 = inlined_call_operand.hbm [shape: f32[1,32], index: 2, kind: input, shape index: {}]
  %s3 = inlined_call_operand.<no memory space> [shape: f32[1,1], index: 3, kind: input, shape index: {}]
  %s4 = inlined_call_operand.hbm [shape: f32[32,64], index: 4, kind: input, shape index: {}]
  %s5 = inlined_call_operand.hbm [shape: f32[1,64], index: 5, kind: input, shape index: {}]
  %s6 = inlined_call_operand.hbm [shape: f32[1,64], index: 6, kind: input, shape index: {}]
  %s7 = inlined_call_operand.hbm [shape: f32[1,64], index: 7, kind: input, shape index: {}]
  %s8 = inlined_call_operand.hbm [shape: f32[64,512], index: 8, kind: input, shape index: {}]
  %s9 = inlined_call_operand.vmem [shape: f32[1,512], index: 9, kind: input, shape index: {}]
  %s10 = inlined_call_operand.vmem [shape: f32[1,512], index: 10, kind: input, shape index: {}]
  %s11 = inlined_call_operand.hbm [shape: f32[1,512], index: 11, kind: input, shape index: {}]
  %s12 = inlined_call_operand.hbm [shape: f32[2,512], index: 12, kind: output, shape index: {}]
  %s13 = sld [smem:[#allocation0]]
  $region94: #{tpu_custom_call.1} parent=0
    _
  %s15 = ssub.s32 1, %s13
  %s16 = scalar_select 0, %s15, %s13
  %17 = sst [smem:[#allocation2]] %s3
  $region1: #{tpu_custom_call.1} parent=0
    #allocation3 [shape = 'u8[8192]{0}', space=vmem, size = 0x2000, scoped, tag = 'input window, operand 0, single buffered']
    #allocation4 [shape = 's32[1]{0}', space=sflag, size = 0x4, scoped, tag = 'scoped memory for tpu_custom_call.1']
    #allocation5 [shape = 's32[1]{0}', space=sflag, size = 0x4, scoped, tag = 'scoped memory for tpu_custom_call.1']
    #allocation6 [shape = 'u8[512]{0}', space=vmem, size = 0x400, scoped, tag = 'input window, operand 1, single buffered']
    #allocation7 [shape = 's32[1]{0}', space=sflag, size = 0x4, scoped, tag = 'scoped memory for tpu_custom_call.1']
    #allocation8 [shape = 'u8[512]{0}', space=vmem, size = 0x400, scoped, tag = 'input window, operand 2, single buffered']
    #allocation9 [shape = 'u8[16384]{0}', space=vmem, size = 0x4000, scoped, tag = 'input window, operand 4, single buffered']
    #allocation10 [shape = 's32[1]{0}', space=sflag, size = 0x4, scoped, tag = 'scoped memory for tpu_custom_call.1']
    #allocation11 [shape = 'u8[512]{0}', space=vmem, size = 0x400, scoped, tag = 'input window, operand 5, single buffered']
    #allocation12 [shape = 'u8[512]{0}', space=vmem, size = 0x400, scoped, tag = 'input window, operand 6, single buffered']
    #allocation13 [shape = 's32[1]{0}', space=sflag, size = 0x4, scoped, tag = 'scoped memory for tpu_custom_call.1']
    #allocation14 [shape = 'u8[512]{0}', space=vmem, size = 0x400, scoped, tag = 'input window, operand 7, single buffered']
    #allocation15 [shape = 'u8[131072]{0}', space=vmem, size = 0x20000, scoped, tag = 'input window, operand 8, single buffered']
    #allocation16 [shape = 's32[1]{0}', space=sflag, size = 0x4, scoped, tag = 'scoped memory for tpu_custom_call.1']
    #allocation17 [shape = 'u8[2048]{0}', space=vmem, size = 0x800, scoped, tag = 'input window, operand 11, single buffered']
    #allocation18 [shape = 'u8[4096]{0}', space=vmem, size = 0x1000, scoped, tag = 'output window, operand 0, single buffered']
    %18 = vsyncpa [#allocation4], 0
    %19 = vsyncpa [#allocation7], 0
    %20 = vsyncpa [#allocation10], 0
    %21 = vsyncpa [#allocation13], 0
    %22 = vsyncpa [#allocation16], 0
    %23 = vsyncpa [#allocation5], 0
    // Predicated region
    $region2: #{tpu_custom_call.1} parent=1 // pred_check
      _
    $region3: #{tpu_custom_call.1} parent=1 // pred_check_branch
      %25 = sbr.rel (0) target = $region5
    $region4: #{tpu_custom_call.1} parent=1 // pred_region
      %27 = vsyncadd [#allocation4], 0
      %s28 = sshll.u32 %s0, 4
      %s29 = int_to_ptr.hbm [resolvable:$true] %s28
      %s30 = sshll.u32 [#allocation3], 4
      %s31 = int_to_ptr.vmem [resolvable:$true] %s30
      %36 = dma.hbm_to_vmem [thread:$0]  %s29, 256, %s31, [#allocation4], 128, 128, 8
    $region5: #{tpu_custom_call.1} parent=1 // pred_fallthru
      _
    // Predicated region
    $region6: #{tpu_custom_call.1} parent=1 // pred_check
      _
    $region7: #{tpu_custom_call.1} parent=1 // pred_check_branch
      %38 = sbr.rel (0) target = $region9
    $region8: #{tpu_custom_call.1} parent=1 // pred_region
      %40 = vsyncadd [#allocation7], 0
      %s42 = sshll.u32 %s1, 4
      %s43 = int_to_ptr.hbm [resolvable:$true] %s42
      %s44 = sshll.u32 [#allocation6], 4
      %s45 = int_to_ptr.vmem [resolvable:$true] %s44
      %47 = dma.hbm_to_vmem [thread:$0]  %s43, 16, %s45, [#allocation7]
    $region9: #{tpu_custom_call.1} parent=1 // pred_fallthru
      _
    // Predicated region
    $region10: #{tpu_custom_call.1} parent=1 // pred_check
      _
    $region11: #{tpu_custom_call.1} parent=1 // pred_check_branch
      %49 = sbr.rel (0) target = $region13
    $region12: #{tpu_custom_call.1} parent=1 // pred_region
      %51 = vsyncadd [#allocation7], 0
      %s53 = sshll.u32 %s2, 4
      %s54 = int_to_ptr.hbm [resolvable:$true] %s53
      %s55 = sshll.u32 [#allocation8], 4
      %s56 = int_to_ptr.vmem [resolvable:$true] %s55
      %58 = dma.hbm_to_vmem [thread:$0]  %s54, 16, %s56, [#allocation7]
    $region13: #{tpu_custom_call.1} parent=1 // pred_fallthru
      _
    // Predicated region
    $region14: #{tpu_custom_call.1} parent=1 // pred_check
      _
    $region15: #{tpu_custom_call.1} parent=1 // pred_check_branch
      %60 = sbr.rel (0) target = $region17
    $region16: #{tpu_custom_call.1} parent=1 // pred_region
      _
    $region17: #{tpu_custom_call.1} parent=1 // pred_fallthru
      _
    // Predicated region
    $region18: #{tpu_custom_call.1} parent=1 // pred_check
      _
    $region19: #{tpu_custom_call.1} parent=1 // pred_check_branch
      %62 = sbr.rel (0) target = $region21
    $region20: #{tpu_custom_call.1} parent=1 // pred_region
      %64 = vsyncadd [#allocation10], 0
      %s65 = sshll.u32 %s4, 4
      %s66 = int_to_ptr.hbm [resolvable:$true] %s65
      %s67 = sshll.u32 [#allocation9], 4
      %s68 = int_to_ptr.vmem [resolvable:$true] %s67
      %73 = dma.hbm_to_vmem [thread:$0]  %s66, 512, %s68, [#allocation10], 128, 128, 8
    $region21: #{tpu_custom_call.1} parent=1 // pred_fallthru
      _
    // Predicated region
    $region22: #{tpu_custom_call.1} parent=1 // pred_check
      _
    $region23: #{tpu_custom_call.1} parent=1 // pred_check_branch
      %75 = sbr.rel (0) target = $region25
    $region24: #{tpu_custom_call.1} parent=1 // pred_region
      %77 = vsyncadd [#allocation10], 0
      %s79 = sshll.u32 %s5, 4
      %s80 = int_to_ptr.hbm [resolvable:$true] %s79
      %s81 = sshll.u32 [#allocation11], 4
      %s82 = int_to_ptr.vmem [resolvable:$true] %s81
      %84 = dma.hbm_to_vmem [thread:$0]  %s80, 16, %s82, [#allocation10]
    $region25: #{tpu_custom_call.1} parent=1 // pred_fallthru
      _
    // Predicated region
    $region26: #{tpu_custom_call.1} parent=1 // pred_check
      _
    $region27: #{tpu_custom_call.1} parent=1 // pred_check_branch
      %86 = sbr.rel (0) target = $region29
    $region28: #{tpu_custom_call.1} parent=1 // pred_region
      %88 = vsyncadd [#allocation13], 0
      %s90 = sshll.u32 %s6, 4
      %s91 = int_to_ptr.hbm [resolvable:$true] %s90
      %s92 = sshll.u32 [#allocation12], 4
      %s93 = int_to_ptr.vmem [resolvable:$true] %s92
      %95 = dma.hbm_to_vmem [thread:$0]  %s91, 16, %s93, [#allocation13]
    $region29: #{tpu_custom_call.1} parent=1 // pred_fallthru
      _
    // Predicated region
    $region30: #{tpu_custom_call.1} parent=1 // pred_check
      _
    $region31: #{tpu_custom_call.1} parent=1 // pred_check_branch
      %97 = sbr.rel (0) target = $region33
    $region32: #{tpu_custom_call.1} parent=1 // pred_region
      %99 = vsyncadd [#allocation13], 0
      %s101 = sshll.u32 %s7, 4
      %s102 = int_to_ptr.hbm [resolvable:$true] %s101
      %s103 = sshll.u32 [#allocation14], 4
      %s104 = int_to_ptr.vmem [resolvable:$true] %s103
      %106 = dma.hbm_to_vmem [thread:$0]  %s102, 16, %s104, [#allocation13]
    $region33: #{tpu_custom_call.1} parent=1 // pred_fallthru
      _
    // Predicated region
    $region34: #{tpu_custom_call.1} parent=1 // pred_check
      _
    $region35: #{tpu_custom_call.1} parent=1 // pred_check_branch
      %108 = sbr.rel (0) target = $region37
    $region36: #{tpu_custom_call.1} parent=1 // pred_region
      %110 = vsyncadd [#allocation16], 0
      %s111 = sshll.u32 %s8, 4
      %s112 = int_to_ptr.hbm [resolvable:$true] %s111
      %s113 = sshll.u32 [#allocation15], 4
      %s114 = int_to_ptr.vmem [resolvable:$true] %s113
      %119 = dma.hbm_to_vmem [thread:$0]  %s112, 4096, %s114, [#allocation16], 512, 512, 32
    $region37: #{tpu_custom_call.1} parent=1 // pred_fallthru
      _
    // Predicated region
    $region38: #{tpu_custom_call.1} parent=1 // pred_check
      _
    $region39: #{tpu_custom_call.1} parent=1 // pred_check_branch
      %121 = sbr.rel (0) target = $region41
    $region40: #{tpu_custom_call.1} parent=1 // pred_region
      _
    $region41: #{tpu_custom_call.1} parent=1 // pred_fallthru
      _
    // Predicated region
    $region42: #{tpu_custom_call.1} parent=1 // pred_check
      _
    $region43: #{tpu_custom_call.1} parent=1 // pred_check_branch
      %123 = sbr.rel (0) target = $region45
    $region44: #{tpu_custom_call.1} parent=1 // pred_region
      _
    $region45: #{tpu_custom_call.1} parent=1 // pred_fallthru
      _
    // Predicated region
    $region46: #{tpu_custom_call.1} parent=1 // pred_check
      _
    $region47: #{tpu_custom_call.1} parent=1 // pred_check_branch
      %125 = sbr.rel (0) target = $region49
    $region48: #{tpu_custom_call.1} parent=1 // pred_region
      %127 = vsyncadd [#allocation16], 0
      %s129 = sshll.u32 %s11, 4
      %s130 = int_to_ptr.hbm [resolvable:$true] %s129
      %s131 = sshll.u32 [#allocation17], 4
      %s132 = int_to_ptr.vmem [resolvable:$true] %s131
      %134 = dma.hbm_to_vmem [thread:$0]  %s130, 64, %s132, [#allocation16]
    $region49: #{tpu_custom_call.1} parent=1 // pred_fallthru
      _
    // Predicated region
    $region50: #{tpu_custom_call.1} parent=1 // pred_check
      _
    $region51: #{tpu_custom_call.1} parent=1 // pred_check_branch
      %136 = sbr.rel (0) target = $region53
    $region52: #{tpu_custom_call.1} parent=1 // pred_region
      %138 = dma.done [#allocation4], 256
    $region53: #{tpu_custom_call.1} parent=1 // pred_fallthru
      _
    // Predicated region
    $region54: #{tpu_custom_call.1} parent=1 // pred_check
      _
    $region55: #{tpu_custom_call.1} parent=1 // pred_check_branch
      %140 = sbr.rel (0) target = $region57
    $region56: #{tpu_custom_call.1} parent=1 // pred_region
      %142 = dma.done [#allocation7], 16
    $region57: #{tpu_custom_call.1} parent=1 // pred_fallthru
      _
    // Predicated region
    $region58: #{tpu_custom_call.1} parent=1 // pred_check
      _
    $region59: #{tpu_custom_call.1} parent=1 // pred_check_branch
      %144 = sbr.rel (0) target = $region61
    $region60: #{tpu_custom_call.1} parent=1 // pred_region
      %146 = dma.done [#allocation7], 16
    $region61: #{tpu_custom_call.1} parent=1 // pred_fallthru
      _
    // Predicated region
    $region62: #{tpu_custom_call.1} parent=1 // pred_check
      _
    $region63: #{tpu_custom_call.1} parent=1 // pred_check_branch
      %148 = sbr.rel (0) target = $region65
    $region64: #{tpu_custom_call.1} parent=1 // pred_region
      %150 = dma.done [#allocation10], 512
    $region65: #{tpu_custom_call.1} parent=1 // pred_fallthru
      _
    // Predicated region
    $region66: #{tpu_custom_call.1} parent=1 // pred_check
      _
    $region67: #{tpu_custom_call.1} parent=1 // pred_check_branch
      %152 = sbr.rel (0) target = $region69
    $region68: #{tpu_custom_call.1} parent=1 // pred_region
      %154 = dma.done [#allocation10], 16
    $region69: #{tpu_custom_call.1} parent=1 // pred_fallthru
      _
    // Predicated region
    $region70: #{tpu_custom_call.1} parent=1 // pred_check
      _
    $region71: #{tpu_custom_call.1} parent=1 // pred_check_branch
      %156 = sbr.rel (0) target = $region73
    $region72: #{tpu_custom_call.1} parent=1 // pred_region
      %158 = dma.done [#allocation13], 16
    $region73: #{tpu_custom_call.1} parent=1 // pred_fallthru
      _
    // Predicated region
    $region74: #{tpu_custom_call.1} parent=1 // pred_check
      _
    $region75: #{tpu_custom_call.1} parent=1 // pred_check_branch
      %160 = sbr.rel (0) target = $region77
    $region76: #{tpu_custom_call.1} parent=1 // pred_region
      %162 = dma.done [#allocation13], 16
    $region77: #{tpu_custom_call.1} parent=1 // pred_fallthru
      _
    // Predicated region
    $region78: #{tpu_custom_call.1} parent=1 // pred_check
      _
    $region79: #{tpu_custom_call.1} parent=1 // pred_check_branch
      %164 = sbr.rel (0) target = $region81
    $region80: #{tpu_custom_call.1} parent=1 // pred_region
      %166 = dma.done [#allocation16], 4096
    $region81: #{tpu_custom_call.1} parent=1 // pred_fallthru
      _
    // Predicated region
    $region82: #{tpu_custom_call.1} parent=1 // pred_check
      _
    $region83: #{tpu_custom_call.1} parent=1 // pred_check_branch
      %168 = sbr.rel (0) target = $region85
    $region84: #{tpu_custom_call.1} parent=1 // pred_region
      %170 = dma.done [#allocation16], 64
    $region85: #{tpu_custom_call.1} parent=1 // pred_fallthru
      _
    %v171 = vld [vmem:[#allocation3] sm:$0xff]
    %v172 = vld [vmem:[#allocation3 + $0x8] sm:$0xff]
    %v173 = vld [vmem:[#allocation8] sm:$0x1]
    %s174 = sld [smem:[#allocation2]]
    %v175 = vstv %s174
    %vm176 = vcmask 261120
    %v178 = vsel %vm176, %v173, 0
    %v181 = vsel %vm176, %v171, 0
    %v184 = vsel %vm176, %v172, 0
    %186 = vmatpush.xpose.msra.mxu0 0.0
    %187 = vmatpush.xpose.msra.mxu0 0.0
    %188 = vmatpush.xpose.msra.mxu0 0.0
    %189 = vmatpush.xpose.msra.mxu0 0.0
    %190 = vmatpush.xpose.msra.mxu0 0.0
    %191 = vmatpush.xpose.msra.mxu0 0.0
    %192 = vmatpush.xpose.msra.mxu0 0.0
    %193 = vmatpush.xpose.msra.mxu0 0.0
    %194 = vmatpush.xpose.msra.mxu0 0.0
    %195 = vmatpush.xpose.msra.mxu0 0.0
    %196 = vmatpush.xpose.msra.mxu0 0.0
    %197 = vmatpush.xpose.msra.mxu0 0.0
    %198 = vmatpush.xpose.msra.mxu0 0.0
    %199 = vmatpush.xpose.msra.mxu0 0.0
    %200 = vmatpush.xpose.msra.mxu0 %v184
    %201 = vmatpush.xpose.msra.mxu0 %v181
    %202 = vmatmul.f32.gmra.mxu0 %v178
    %v203 = vpop.f32.mrf.mxu0
    %v204 = vadd.f32 %v175, %v203
    %205 = vdwg.mxu0
    %v206 = vld [vmem:[#allocation6] sm:$0x1]
    %v207 = vlaneseq
    %v208 = vshrl.u32 %v207, 7
    %v209 = vperm.slane %v206, 0
    %vm210 = vcmp.eq.s32.totalorder %v209, %v208
    %v211 = vperm.slane %v204, 0
    %v212 = vsel %vm210, %v211, -1e+30
    %vm213 = vcmask 123904
    %v214 = vsel %vm213, %v212, -inf
    %215 = vmax.xlane.f32.xlu0 %v214
    %v216 = vpop.xlane.xlu0 %215
    %v217 = vsub.f32 %v212, %v216
    %v218 = vmul.f32 %v217, 1.442695
    %v219 = vpow.pop %v218
    %v220 = vsel %vm210, 1, 0
    %v221 = vcvt.s32.f32 %v220
    %v222 = vmul.f32 %v219, %v221
    %v223 = vsel %vm213, %v222, 0.0
    %224 = vadd.xlane.f32.xlu0 %v223
    %v225 = vpop.xlane.xlu0 %224
    %v226 = vmax.f32 %v225, 1e-30
    %v227 = vrcp.pop %v226
    %v228 = vmul.f32 %v226, %v227
    %v229 = vsub.f32 1.0, %v228
    %v230 = vmul.f32 %v227, %v229
    %v231 = vadd.f32 %v227, %v230
    %vm232 = vweird.f32 %v226
    %vm233 = vweird.f32 %v227
    %vm234 = vmor %vm232, %vm233
    %v235 = vsel %vm234, %v227, %v231
    %v236 = vand.u32 2147483647, %v226
    %vm237 = vcmp.eq.f32.partialorder %v236, 8.507059e+37
    %v238 = vand.u32 %v226, 2147483648
    %v239 = vor.u32 1.1754944e-38, %v238
    %v240 = vsel %vm237, %v239, %v235
    %v241 = vmul.f32 %v222, %v240
    %vm242 = vcmask 130048
    %v244 = vsel %vm242, %v241, 0
    %246 = vmatpush.msra.mxu0 0.0
    %247 = vmatpush.msra.mxu0 0.0
    %248 = vmatpush.msra.mxu0 0.0
    %249 = vmatpush.msra.mxu0 0.0
    %250 = vmatpush.msra.mxu0 0.0
    %251 = vmatpush.msra.mxu0 0.0
    %252 = vmatpush.msra.mxu0 0.0
    %253 = vmatpush.msra.mxu0 0.0
    %254 = vmatpush.msra.mxu0 0.0
    %255 = vmatpush.msra.mxu0 0.0
    %256 = vmatpush.msra.mxu0 0.0
    %257 = vmatpush.msra.mxu0 0.0
    %258 = vmatpush.msra.mxu0 0.0
    %259 = vmatpush.msra.mxu0 0.0
    %260 = vmatpush.msra.mxu0 %v172
    %261 = vmatpush.msra.mxu0 %v171
    %262 = vmatmul.f32.gmra.mxu0 %v244
    %v263 = vpop.f32.mrf.mxu0
    %v264 = vadd.f32 0.0, %v263
    %265 = vdwg.mxu0
    %v266 = vld [vmem:[#allocation9] sm:$0xff]
    %v267 = vld [vmem:[#allocation9 + $0x8] sm:$0xff]
    %v268 = vld [vmem:[#allocation9 + $0x10] sm:$0xff]
    %v269 = vld [vmem:[#allocation9 + $0x18] sm:$0xff]
    %v270 = vld [vmem:[#allocation11] sm:$0x1]
    %v272 = vperm.slane %v270, 0
    %v275 = vsel %vm176, %v264, 0
    %277 = vmatpush.msra.mxu0 0.0
    %278 = vmatpush.msra.mxu0 0.0
    %279 = vmatpush.msra.mxu0 0.0
    %280 = vmatpush.msra.mxu0 0.0
    %281 = vmatpush.msra.mxu0 0.0
    %282 = vmatpush.msra.mxu0 0.0
    %283 = vmatpush.msra.mxu0 0.0
    %284 = vmatpush.msra.mxu0 0.0
    %285 = vmatpush.msra.mxu0 0.0
    %286 = vmatpush.msra.mxu0 0.0
    %287 = vmatpush.msra.mxu0 0.0
    %288 = vmatpush.msra.mxu0 0.0
    %289 = vmatpush.msra.mxu0 %v269
    %290 = vmatpush.msra.mxu0 %v268
    %291 = vmatpush.msra.mxu0 %v267
    %292 = vmatpush.msra.mxu0 %v266
    %293 = vmatmul.f32.gmra.mxu0 %v275
    %v294 = vpop.f32.mrf.mxu0
    %v295 = vadd.f32 %v272, %v294
    %296 = vdwg.mxu0
    %v297 = vld [vmem:[#allocation12] sm:$0x1]
    %v298 = vld [vmem:[#allocation14] sm:$0x1]
    %vm299 = vcmask 517120
    %v300 = vsel %vm299, %v295, 0.0
    %v301 = vrot.slane %v300, 4
    %v302 = vadd.f32 %v300, %v301
    %v303 = vrot.slane %v302, 2
    %v304 = vadd.f32 %v302, %v303
    %v305 = vrot.slane %v304, 1
    %v306 = vadd.f32 %v304, %v305
    %v307 = vrcp.pop 2.0
    %v308 = vmul.f32 2.0, %v307
    %v309 = vsub.f32 1.0, %v308
    %v310 = vmul.f32 %v307, %v309
    %v311 = vadd.f32 %v307, %v310
    %vm312 = vweird.f32 %v307
    %v313 = vsel %vm312, %v307, %v311
    %v314 = vmul.f32 %v306, %v313
    %v315 = vsub.f32 %v295, %v314
    %v316 = vmul.f32 %v315, %v315
    %v317 = vsel %vm299, %v316, 0.0
    %v318 = vrot.slane %v317, 4
    %v319 = vadd.f32 %v317, %v318
    %v320 = vrot.slane %v319, 2
    %v321 = vadd.f32 %v319, %v320
    %v322 = vrot.slane %v321, 1
    %v323 = vadd.f32 %v321, %v322
    %v324 = vmul.f32 %v323, %v313
    %v325 = vadd.f32 %v324, 1e-05
    %v326 = vrsqrt.pop %v325
    %v327 = vmul.f32 %v326, %v325
    %v328 = vmul.f32 %v327, %v326
    %v329 = vmul.f32 0.5, %v328
    %v330 = vsub.f32 1.5, %v329
    %v331 = vmul.f32 %v326, %v330
    %vm332 = vweird.f32 %v325
    %vm333 = vweird.f32 %v326
    %vm334 = vmor %vm332, %vm333
    %v335 = vsel %vm334, %v326, %v331
    %v336 = vmul.f32 %v315, %v335
    %v338 = vperm.slane %v297, 0
    %v340 = vmul.f32 %v336, %v338
    %v342 = vperm.slane %v298, 0
    %v344 = vadd.f32 %v340, %v342
    %vm345 = vcmp.gt.f32.partialorder %v344, 0.0
    %v346 = vmul.f32 %v344, 1.442695
    %v347 = vpow.pop %v346
    %v348 = vsub.f32 %v347, 1.0
    %v349 = vsel %vm345, %v344, %v348
    %v350 = vld [vmem:[#allocation15] sm:$0xff]
    %v351 = vld [vmem:[#allocation15 + $0x8] sm:$0xff]
    %v352 = vld [vmem:[#allocation15 + $0x10] sm:$0xff]
    %v353 = vld [vmem:[#allocation15 + $0x18] sm:$0xff]
    %v354 = vld [vmem:[#allocation15 + $0x20] sm:$0xff]
    %v355 = vld [vmem:[#allocation15 + $0x28] sm:$0xff]
    %v356 = vld [vmem:[#allocation15 + $0x30] sm:$0xff]
    %v357 = vld [vmem:[#allocation15 + $0x38] sm:$0xff]
    %v358 = vld [vmem:[#allocation15 + $0x40] sm:$0xff]
    %v359 = vld [vmem:[#allocation15 + $0x48] sm:$0xff]
    %v360 = vld [vmem:[#allocation15 + $0x50] sm:$0xff]
    %v361 = vld [vmem:[#allocation15 + $0x58] sm:$0xff]
    %v362 = vld [vmem:[#allocation15 + $0x60] sm:$0xff]
    %v363 = vld [vmem:[#allocation15 + $0x68] sm:$0xff]
    %v364 = vld [vmem:[#allocation15 + $0x70] sm:$0xff]
    %v365 = vld [vmem:[#allocation15 + $0x78] sm:$0xff]
    %v366 = vld [vmem:[#allocation15 + $0x80] sm:$0xff]
    %v367 = vld [vmem:[#allocation15 + $0x88] sm:$0xff]
    %v368 = vld [vmem:[#allocation15 + $0x90] sm:$0xff]
    %v369 = vld [vmem:[#allocation15 + $0x98] sm:$0xff]
    %v370 = vld [vmem:[#allocation15 + $0xa0] sm:$0xff]
    %v371 = vld [vmem:[#allocation15 + $0xa8] sm:$0xff]
    %v372 = vld [vmem:[#allocation15 + $0xb0] sm:$0xff]
    %v373 = vld [vmem:[#allocation15 + $0xb8] sm:$0xff]
    %v374 = vld [vmem:[#allocation15 + $0xc0] sm:$0xff]
    %v375 = vld [vmem:[#allocation15 + $0xc8] sm:$0xff]
    %v376 = vld [vmem:[#allocation15 + $0xd0] sm:$0xff]
    %v377 = vld [vmem:[#allocation15 + $0xd8] sm:$0xff]
    %v378 = vld [vmem:[#allocation15 + $0xe0] sm:$0xff]
    %v379 = vld [vmem:[#allocation15 + $0xe8] sm:$0xff]
    %v380 = vld [vmem:[#allocation15 + $0xf0] sm:$0xff]
    %v381 = vld [vmem:[#allocation15 + $0xf8] sm:$0xff]
    %v382 = vld [vmem:[%s9] sm:$0xf]
    %v384 = vperm.slane %v382, 0
    %v385 = vperm.slane %v382, 1
    %v386 = vperm.slane %v382, 2
    %v387 = vperm.slane %v382, 3
    %vm392 = vcmask 523264
    %v394 = vsel %vm392, %v349, 0
    %396 = vmatpush.msra.mxu0 0.0
    %397 = vmatpush.msra.mxu0 0.0
    %398 = vmatpush.msra.mxu0 0.0
    %399 = vmatpush.msra.mxu0 0.0
    %400 = vmatpush.msra.mxu0 0.0
    %401 = vmatpush.msra.mxu0 0.0
    %402 = vmatpush.msra.mxu0 0.0
    %403 = vmatpush.msra.mxu0 0.0
    %404 = vmatpush.msra.mxu0 %v378
    %405 = vmatpush.msra.mxu0 %v374
    %406 = vmatpush.msra.mxu0 %v370
    %407 = vmatpush.msra.mxu0 %v366
    %408 = vmatpush.msra.mxu0 %v362
    %409 = vmatpush.msra.mxu0 %v358
    %410 = vmatpush.msra.mxu0 %v354
    %411 = vmatpush.msra.mxu0 %v350
    %412 = vmatmul.f32.gmra.mxu0 %v394
    %v413 = vpop.f32.mrf.mxu0
    %v414 = vadd.f32 %v384, %v413
    %415 = vdwg.mxu0
    %416 = vmatpush.msra.mxu0 0.0
    %417 = vmatpush.msra.mxu0 0.0
    %418 = vmatpush.msra.mxu0 0.0
    %419 = vmatpush.msra.mxu0 0.0
    %420 = vmatpush.msra.mxu0 0.0
    %421 = vmatpush.msra.mxu0 0.0
    %422 = vmatpush.msra.mxu0 0.0
    %423 = vmatpush.msra.mxu0 0.0
    %424 = vmatpush.msra.mxu0 %v379
    %425 = vmatpush.msra.mxu0 %v375
    %426 = vmatpush.msra.mxu0 %v371
    %427 = vmatpush.msra.mxu0 %v367
    %428 = vmatpush.msra.mxu0 %v363
    %429 = vmatpush.msra.mxu0 %v359
    %430 = vmatpush.msra.mxu0 %v355
    %431 = vmatpush.msra.mxu0 %v351
    %432 = vmatmul.f32.gmra.mxu0 %v394
    %v433 = vpop.f32.mrf.mxu0
    %v434 = vadd.f32 %v385, %v433
    %435 = vdwg.mxu0
    %436 = vmatpush.msra.mxu0 0.0
    %437 = vmatpush.msra.mxu0 0.0
    %438 = vmatpush.msra.mxu0 0.0
    %439 = vmatpush.msra.mxu0 0.0
    %440 = vmatpush.msra.mxu0 0.0
    %441 = vmatpush.msra.mxu0 0.0
    %442 = vmatpush.msra.mxu0 0.0
    %443 = vmatpush.msra.mxu0 0.0
    %444 = vmatpush.msra.mxu0 %v380
    %445 = vmatpush.msra.mxu0 %v376
    %446 = vmatpush.msra.mxu0 %v372
    %447 = vmatpush.msra.mxu0 %v368
    %448 = vmatpush.msra.mxu0 %v364
    %449 = vmatpush.msra.mxu0 %v360
    %450 = vmatpush.msra.mxu0 %v356
    %451 = vmatpush.msra.mxu0 %v352
    %452 = vmatmul.f32.gmra.mxu0 %v394
    %v453 = vpop.f32.mrf.mxu0
    %v454 = vadd.f32 %v386, %v453
    %455 = vdwg.mxu0
    %456 = vmatpush.msra.mxu0 0.0
    %457 = vmatpush.msra.mxu0 0.0
    %458 = vmatpush.msra.mxu0 0.0
    %459 = vmatpush.msra.mxu0 0.0
    %460 = vmatpush.msra.mxu0 0.0
    %461 = vmatpush.msra.mxu0 0.0
    %462 = vmatpush.msra.mxu0 0.0
    %463 = vmatpush.msra.mxu0 0.0
    %464 = vmatpush.msra.mxu0 %v381
    %465 = vmatpush.msra.mxu0 %v377
    %466 = vmatpush.msra.mxu0 %v373
    %467 = vmatpush.msra.mxu0 %v369
    %468 = vmatpush.msra.mxu0 %v365
    %469 = vmatpush.msra.mxu0 %v361
    %470 = vmatpush.msra.mxu0 %v357
    %471 = vmatpush.msra.mxu0 %v353
    %472 = vmatmul.f32.gmra.mxu0 %v394
    %v473 = vpop.f32.mrf.mxu0
    %v474 = vadd.f32 %v387, %v473
    %475 = vdwg.mxu0
    %v476 = vld [vmem:[%s10] sm:$0xf]
    %v477 = vld [vmem:[#allocation17] sm:$0xf]
    %vm478 = vcmask 1041408
    %v479 = vsel %vm478, %v414, 0.0
    %v480 = vrot.slane %v479, 4
    %v481 = vadd.f32 %v479, %v480
    %v482 = vrot.slane %v481, 2
    %v483 = vadd.f32 %v481, %v482
    %v484 = vrot.slane %v483, 1
    %v485 = vadd.f32 %v483, %v484
    %v486 = vsel %vm478, %v434, 0.0
    %v487 = vrot.slane %v486, 4
    %v488 = vadd.f32 %v486, %v487
    %v489 = vrot.slane %v488, 2
    %v490 = vadd.f32 %v488, %v489
    %v491 = vrot.slane %v490, 1
    %v492 = vadd.f32 %v490, %v491
    %v493 = vsel %vm478, %v454, 0.0
    %v494 = vrot.slane %v493, 4
    %v495 = vadd.f32 %v493, %v494
    %v496 = vrot.slane %v495, 2
    %v497 = vadd.f32 %v495, %v496
    %v498 = vrot.slane %v497, 1
    %v499 = vadd.f32 %v497, %v498
    %v500 = vsel %vm478, %v474, 0.0
    %v501 = vrot.slane %v500, 4
    %v502 = vadd.f32 %v500, %v501
    %v503 = vrot.slane %v502, 2
    %v504 = vadd.f32 %v502, %v503
    %v505 = vrot.slane %v504, 1
    %v506 = vadd.f32 %v504, %v505
    %v507 = vmul.f32 %v485, %v313
    %v508 = vmul.f32 %v492, %v313
    %v509 = vmul.f32 %v499, %v313
    %v510 = vmul.f32 %v506, %v313
    %v511 = vsub.f32 %v414, %v507
    %v512 = vsub.f32 %v434, %v508
    %v513 = vsub.f32 %v454, %v509
    %v514 = vsub.f32 %v474, %v510
    %v515 = vmul.f32 %v511, %v511
    %v516 = vmul.f32 %v512, %v512
    %v517 = vmul.f32 %v513, %v513
    %v518 = vmul.f32 %v514, %v514
    %v519 = vsel %vm478, %v515, 0.0
    %v520 = vrot.slane %v519, 4
    %v521 = vadd.f32 %v519, %v520
    %v522 = vrot.slane %v521, 2
    %v523 = vadd.f32 %v521, %v522
    %v524 = vrot.slane %v523, 1
    %v525 = vadd.f32 %v523, %v524
    %v526 = vsel %vm478, %v516, 0.0
    %v527 = vrot.slane %v526, 4
    %v528 = vadd.f32 %v526, %v527
    %v529 = vrot.slane %v528, 2
    %v530 = vadd.f32 %v528, %v529
    %v531 = vrot.slane %v530, 1
    %v532 = vadd.f32 %v530, %v531
    %v533 = vsel %vm478, %v517, 0.0
    %v534 = vrot.slane %v533, 4
    %v535 = vadd.f32 %v533, %v534
    %v536 = vrot.slane %v535, 2
    %v537 = vadd.f32 %v535, %v536
    %v538 = vrot.slane %v537, 1
    %v539 = vadd.f32 %v537, %v538
    %v540 = vsel %vm478, %v518, 0.0
    %v541 = vrot.slane %v540, 4
    %v542 = vadd.f32 %v540, %v541
    %v543 = vrot.slane %v542, 2
    %v544 = vadd.f32 %v542, %v543
    %v545 = vrot.slane %v544, 1
    %v546 = vadd.f32 %v544, %v545
    %v547 = vmul.f32 %v525, %v313
    %v548 = vmul.f32 %v532, %v313
    %v549 = vmul.f32 %v539, %v313
    %v550 = vmul.f32 %v546, %v313
    %v551 = vadd.f32 %v547, 1e-05
    %v552 = vadd.f32 %v548, 1e-05
    %v553 = vadd.f32 %v549, 1e-05
    %v554 = vadd.f32 %v550, 1e-05
    %v555 = vrsqrt.pop %v551
    %v556 = vmul.f32 %v555, %v551
    %v557 = vmul.f32 %v556, %v555
    %v558 = vmul.f32 0.5, %v557
    %v559 = vsub.f32 1.5, %v558
    %v560 = vmul.f32 %v555, %v559
    %vm561 = vweird.f32 %v551
    %vm562 = vweird.f32 %v555
    %vm563 = vmor %vm561, %vm562
    %v564 = vsel %vm563, %v555, %v560
    %v565 = vrsqrt.pop %v552
    %v566 = vmul.f32 %v565, %v552
    %v567 = vmul.f32 %v566, %v565
    %v568 = vmul.f32 0.5, %v567
    %v569 = vsub.f32 1.5, %v568
    %v570 = vmul.f32 %v565, %v569
    %vm571 = vweird.f32 %v552
    %vm572 = vweird.f32 %v565
    %vm573 = vmor %vm571, %vm572
    %v574 = vsel %vm573, %v565, %v570
    %v575 = vrsqrt.pop %v553
    %v576 = vmul.f32 %v575, %v553
    %v577 = vmul.f32 %v576, %v575
    %v578 = vmul.f32 0.5, %v577
    %v579 = vsub.f32 1.5, %v578
    %v580 = vmul.f32 %v575, %v579
    %vm581 = vweird.f32 %v553
    %vm582 = vweird.f32 %v575
    %vm583 = vmor %vm581, %vm582
    %v584 = vsel %vm583, %v575, %v580
    %v585 = vrsqrt.pop %v554
    %v586 = vmul.f32 %v585, %v554
    %v587 = vmul.f32 %v586, %v585
    %v588 = vmul.f32 0.5, %v587
    %v589 = vsub.f32 1.5, %v588
    %v590 = vmul.f32 %v585, %v589
    %vm591 = vweird.f32 %v554
    %vm592 = vweird.f32 %v585
    %vm593 = vmor %vm591, %vm592
    %v594 = vsel %vm593, %v585, %v590
    %v595 = vmul.f32 %v511, %v564
    %v596 = vmul.f32 %v512, %v574
    %v597 = vmul.f32 %v513, %v584
    %v598 = vmul.f32 %v514, %v594
    %v600 = vperm.slane %v476, 0
    %v601 = vperm.slane %v476, 1
    %v602 = vperm.slane %v476, 2
    %v603 = vperm.slane %v476, 3
    %v608 = vmul.f32 %v595, %v600
    %v609 = vmul.f32 %v596, %v601
    %v610 = vmul.f32 %v597, %v602
    %v611 = vmul.f32 %v598, %v603
    %v613 = vperm.slane %v477, 0
    %v614 = vperm.slane %v477, 1
    %v615 = vperm.slane %v477, 2
    %v616 = vperm.slane %v477, 3
    %v621 = vadd.f32 %v608, %v613
    %v622 = vadd.f32 %v609, %v614
    %v623 = vadd.f32 %v610, %v615
    %v624 = vadd.f32 %v611, %v616
    %vm625 = vcmp.gt.f32.partialorder %v621, 0.0
    %vm626 = vcmp.gt.f32.partialorder %v622, 0.0
    %vm627 = vcmp.gt.f32.partialorder %v623, 0.0
    %vm628 = vcmp.gt.f32.partialorder %v624, 0.0
    %v629 = vmul.f32 %v621, 1.442695
    %v630 = vpow.pop %v629
    %v631 = vmul.f32 %v622, 1.442695
    %v632 = vpow.pop %v631
    %v633 = vmul.f32 %v623, 1.442695
    %v634 = vpow.pop %v633
    %v635 = vmul.f32 %v624, 1.442695
    %v636 = vpow.pop %v635
    %v637 = vsub.f32 %v630, 1.0
    %v638 = vsub.f32 %v632, 1.0
    %v639 = vsub.f32 %v634, 1.0
    %v640 = vsub.f32 %v636, 1.0
    %v641 = vsel %vm625, %v621, %v637
    %v642 = vsel %vm626, %v622, %v638
    %v643 = vsel %vm627, %v623, %v639
    %v644 = vsel %vm628, %v624, %v640
    %v649 = vrot.slane %v642, 6
    %v650 = vrot.slane %v643, 4
    %v651 = vrot.slane %v644, 2
    %v652 = vsel %vm478, %v641, %v649
    %vm653 = vcmask 1045508
    %v654 = vsel %vm653, %v650, %v651
    %vm655 = vcmask 1043456
    %v656 = vsel %vm655, %v652, %v654
    %658 = vst [vmem:[#allocation18] sm:$0xff] %v656
    // Predicated region
    $region86: #{tpu_custom_call.1} parent=1 // pred_check
      _
    $region87: #{tpu_custom_call.1} parent=1 // pred_check_branch
      %660 = sbr.rel (0) target = $region89
    $region88: #{tpu_custom_call.1} parent=1 // pred_region
      %662 = vsyncadd [#allocation5], 0
      %s664 = sshll.u32 [#allocation18], 4
      %s665 = int_to_ptr.vmem [resolvable:$true] %s664
      %s666 = sshll.u32 %s12, 4
      %s667 = int_to_ptr.hbm [resolvable:$true] %s666
      %669 = dma.vmem_to_hbm [thread:$0]  %s665, 128, %s667, [#allocation5]
    $region89: #{tpu_custom_call.1} parent=1 // pred_fallthru
      _
    // Predicated region
    $region90: #{tpu_custom_call.1} parent=1 // pred_check
      _
    $region91: #{tpu_custom_call.1} parent=1 // pred_check_branch
      %671 = sbr.rel (0) target = $region93
    $region92: #{tpu_custom_call.1} parent=1 // pred_region
      %673 = dma.done [#allocation5], 128
    $region93: #{tpu_custom_call.1} parent=1 // pred_fallthru
      _
    %674 = vsyncpa [#allocation4], 1
    %675 = vsyncpa [#allocation7], 1
    %676 = vsyncpa [#allocation10], 1
    %677 = vsyncpa [#allocation13], 1
    %678 = vsyncpa [#allocation16], 1
    %679 = vsyncpa [#allocation5], 1

</llo_original>
